<compile_context>
chip_gen: v7x
topology: tpu7x:2x2x1
jax: 0.10.0
libtpu: 0.0.40
codegen_flags: <defaults>
</compile_context>

<pallas_src>
import functools

import jax
import jax.numpy as jnp
from jax import lax
from jax.experimental import pallas as pl
from jax.experimental.pallas import tpu as pltpu


def _round_up(x, m):
    return ((x + m - 1) // m) * m


# ----------------------------------------------------------------------------
# Fused kernel: GraphLearner('attention') + softmax + GCNConv_dense stack.
# Single block, no grid (all operands fit VMEM at this problem size).
# ----------------------------------------------------------------------------
def fused_gcn_dae_kernel(*refs, num_pers, num_layers):
    feat_ref, wlt_ref, x_ref = refs[:3]
    layer_refs = refs[3:3 + 2 * num_layers]
    adj_ref = refs[3 + 2 * num_layers]
    out_ref = refs[4 + 2 * num_layers]

    # --- Graph learner: H = relu(F @ W_all^T); attention = H @ H^T / P
    h = jnp.maximum(
        jnp.dot(feat_ref[...], wlt_ref[...], preferred_element_type=jnp.float32),
        0.0)
    att = lax.dot_general(h, h, (((1,), (1,)), ((), ())),
                          preferred_element_type=jnp.float32)
    att = att * (1.0 / num_pers)

    # --- GCN_DAE.get_adj finalize: softmax over last dim.
    m = jnp.max(att, axis=-1, keepdims=True)
    e = jnp.exp(att - m)
    s = jnp.sum(e, axis=-1, keepdims=True)
    adj = e * pl.reciprocal(s, approx=True)
    adj_ref[...] = adj.astype(adj_ref.dtype)

    # --- GCNConv_dense stack: h = Adj @ (h @ W^T + b), ReLU except last layer.
    # (F.dropout / dropout_adj are identity in eval mode.)
    hidden = x_ref[...]
    for li in range(num_layers):
        wt = layer_refs[2 * li][...]        # pre-transposed, lane-padded weight
        b = layer_refs[2 * li + 1][...]     # (1, O_pad) lane-padded bias
        pre = jnp.dot(hidden, wt, preferred_element_type=jnp.float32) + b
        hidden = jnp.dot(adj, pre, preferred_element_type=jnp.float32)
        if li < num_layers - 1:
            hidden = jnp.maximum(hidden, 0.0)
    out_ref[...] = hidden.astype(out_ref.dtype)


# ----------------------------------------------------------------------------
# Wrapper: layout plumbing (concat / zero-pad / transpose params) + pallas_call
# ----------------------------------------------------------------------------
def gcn_dae_forward(params, features, x, *, lane=128):
    N, D = features.shape
    gl_W = params["gl_W"]                       # (P, H, D), nn.Linear weights
    P, H, _ = gl_W.shape

    # Graph-learner weights: concat perspectives -> (P*H, D), pad rows to a
    # lane multiple (zero rows are exact: relu(0)=0 contributes 0 to H@H^T),
    # then transpose once so the kernel does a plain row-major matmul.
    PH = P * H
    PH_pad = _round_up(PH, lane)
    wl = gl_W.reshape(PH, D)
    if PH_pad != PH:
        wl = jnp.concatenate(
            [wl, jnp.zeros((PH_pad - PH, D), wl.dtype)], axis=0)
    wl_t = wl.T                                 # (D, PH_pad)

    # GCN layers: zero-pad output dims (and chained input dims) to lane
    # multiples; exact because padded columns stay identically zero through
    # bias(0), Adj@, and relu.  Pre-transpose to (I_pad, O_pad).
    layer_ops = []
    prev_dim = x.shape[1]
    prev_pad = prev_dim
    for (W, b) in params["layers"]:
        O, I = W.shape
        assert I == prev_dim
        O_pad = _round_up(O, lane)
        Wp = jnp.zeros((O_pad, prev_pad), W.dtype).at[:O, :I].set(W)
        bp = jnp.zeros((1, O_pad), b.dtype).at[0, :O].set(b)
        layer_ops.extend([Wp.T, bp])
        prev_dim, prev_pad = O, O_pad

    num_layers = len(params["layers"])
    nclasses = params["layers"][-1][0].shape[0]
    out_pad = prev_pad

    inputs = [features, wl_t, x] + layer_ops
    vmem_spec = pl.BlockSpec(memory_space=pltpu.MemorySpace.VMEM)

    adj, out_padded = pl.pallas_call(
        functools.partial(fused_gcn_dae_kernel,
                          num_pers=P, num_layers=num_layers),
        out_shape=(jax.ShapeDtypeStruct((N, N), jnp.float32),
                   jax.ShapeDtypeStruct((N, out_pad), jnp.float32)),
        in_specs=[vmem_spec] * len(inputs),
        out_specs=(vmem_spec, vmem_spec),
    )(*inputs)

    return out_padded[:, :nclasses], adj


# ----------------------------------------------------------------------------
# Pure-JAX reference (matches the PyTorch forward in eval mode).
# ----------------------------------------------------------------------------
def gcn_dae_reference(params, features, x):
    gl_W = params["gl_W"]
    P = gl_W.shape[0]
    att = 0.0
    for p in range(P):
        hp = jax.nn.relu(features @ gl_W[p].T)
        att = att + hp @ hp.T
    att = att / P
    adj = jax.nn.softmax(att, axis=-1)
    h = x
    nl = len(params["layers"])
    for i, (W, b) in enumerate(params["layers"]):
        h = adj @ (h @ W.T + b)
        if i < nl - 1:
            h = jax.nn.relu(h)
    return h, adj


if __name__ == "__main__":
    import math

    # Small config consistent with the module:
    # nlayers=2, in_dim=32, hidden_dim=32, nclasses=8, feature_hidden_size=32,
    # graph_learn_hidden_size=32, graph_learn_num_pers=4, k=None, nnodes=64.
    N = 64          # number of nodes
    D = 32          # feature_hidden_size (features dim)
    H = 32          # graph_learn_hidden_size
    P = 4           # graph_learn_num_pers
    in_dim = 32
    hidden_dim = 32
    nclasses = 8

    key = jax.random.PRNGKey(0)
    k1, k2, k3, k4, k5 = jax.random.split(key, 5)

    features = jax.random.normal(k1, (N, D), jnp.float32)
    x = jax.random.normal(k2, (N, in_dim), jnp.float32)

    # Deterministic synthetic parameters (shapes match the PyTorch module).
    gl_W = jax.random.normal(k3, (P, H, D), jnp.float32) / math.sqrt(D)
    W0 = jax.random.normal(k4, (hidden_dim, in_dim), jnp.float32) / math.sqrt(in_dim)
    b0 = jnp.zeros((hidden_dim,), jnp.float32)
    W1 = jax.random.normal(k5, (nclasses, hidden_dim), jnp.float32) / math.sqrt(hidden_dim)
    b1 = jnp.zeros((nclasses,), jnp.float32)

    params = {"gl_W": gl_W, "layers": [(W0, b0), (W1, b1)]}

    out, adj_ = gcn_dae_forward(params, features, x)
    jax.block_until_ready((out, adj_))
    assert out.shape == (N, nclasses) and adj_.shape == (N, N)

    # Correctness vs pure-JAX reference (loose tolerance covers approx recip).
    ref_out, ref_adj = gcn_dae_reference(params, features, x)
    assert bool(jnp.allclose(adj_, ref_adj, rtol=1e-2, atol=1e-3))
    assert bool(jnp.allclose(out, ref_out, rtol=1e-2, atol=1e-3))

    print("KERNEL_OK")
</pallas_src>

<mosaic_0001>
module attributes {stable_mosaic.version = 11 : i64} {
  func.func @fused_gcn_dae_kernel(%arg0: memref<64x32xf32, #tpu.memory_space<vmem>>, %arg1: memref<32x128xf32, #tpu.memory_space<vmem>>, %arg2: memref<64x32xf32, #tpu.memory_space<vmem>>, %arg3: memref<32x128xf32, #tpu.memory_space<vmem>>, %arg4: memref<1x128xf32, #tpu.memory_space<vmem>>, %arg5: memref<128x128xf32, #tpu.memory_space<vmem>>, %arg6: memref<1x128xf32, #tpu.memory_space<vmem>>, %arg7: memref<64x64xf32, #tpu.memory_space<vmem>>, %arg8: memref<64x128xf32, #tpu.memory_space<vmem>>) attributes {dimension_semantics = [], scalar_prefetch = 0 : i64, scratch_operands = 0 : i64, tpu.core_type = #tpu.core_type<tc>} {
    %c0 = arith.constant 0 : index
    %c0_0 = arith.constant 0 : index
    %0 = vector.load %arg0[%c0, %c0_0] : memref<64x32xf32, #tpu.memory_space<vmem>>, vector<64x32xf32>
    %c0_1 = arith.constant 0 : index
    %c0_2 = arith.constant 0 : index
    %1 = vector.load %arg1[%c0_1, %c0_2] : memref<32x128xf32, #tpu.memory_space<vmem>>, vector<32x128xf32>
    %cst = arith.constant dense<0.000000e+00> : vector<64x128xf32>
    %2 = tpu.matmul %0, %1, %cst {dimension_numbers = #tpu.dot_dimension_numbers<[1], [0], [0], [1], [0, 0, 1, 1], [], []>} : vector<64x32xf32>, vector<32x128xf32>, vector<64x128xf32> -> vector<64x128xf32>
    %cst_3 = arith.constant 0.000000e+00 : f32
    %3 = vector.broadcast %cst_3 : f32 to vector<64x128xf32>
    %4 = arith.maximumf %2, %3 : vector<64x128xf32>
    %cst_4 = arith.constant dense<0.000000e+00> : vector<64x64xf32>
    %5 = tpu.matmul %4, %4, %cst_4 {dimension_numbers = #tpu.dot_dimension_numbers<[1], [1], [0], [0], [0, 0, 1, 0], [], []>} : vector<64x128xf32>, vector<64x128xf32>, vector<64x64xf32> -> vector<64x64xf32>
    %cst_5 = arith.constant 2.500000e-01 : f32
    %6 = vector.broadcast %cst_5 : f32 to vector<64x64xf32>
    %7 = arith.mulf %5, %6 : vector<64x64xf32>
    %cst_6 = arith.constant dense<0xFF800000> : vector<64xf32>
    %8 = vector.multi_reduction <maximumf>, %7, %cst_6 [1] : vector<64x64xf32> to vector<64xf32>
    %9 = vector.shape_cast %8 : vector<64xf32> to vector<64x1xf32>
    %10 = vector.broadcast %9 : vector<64x1xf32> to vector<64x64xf32>
    %11 = arith.subf %7, %10 : vector<64x64xf32>
    %12 = math.exp %11 : vector<64x64xf32>
    %cst_7 = arith.constant dense<0.000000e+00> : vector<64xf32>
    %13 = vector.multi_reduction <add>, %12, %cst_7 [1] : vector<64x64xf32> to vector<64xf32>
    %14 = vector.shape_cast %13 : vector<64xf32> to vector<64x1xf32>
    %15 = tpu.reciprocal %14 {approx = true} : vector<64x1xf32> -> vector<64x1xf32>
    %16 = vector.broadcast %15 : vector<64x1xf32> to vector<64x64xf32>
    %17 = arith.mulf %12, %16 : vector<64x64xf32>
    %c0_8 = arith.constant 0 : index
    %c0_9 = arith.constant 0 : index
    %18 = vector.load %arg7[%c0_8, %c0_9] : memref<64x64xf32, #tpu.memory_space<vmem>>, vector<64x64xf32>
    tpu.vector_store %arg7[%c0_8, %c0_9], %17 {strides = array<i32>} : memref<64x64xf32, #tpu.memory_space<vmem>>, vector<64x64xf32>,
    %c0_10 = arith.constant 0 : index
    %c0_11 = arith.constant 0 : index
    %19 = vector.load %arg2[%c0_10, %c0_11] : memref<64x32xf32, #tpu.memory_space<vmem>>, vector<64x32xf32>
    %c0_12 = arith.constant 0 : index
    %c0_13 = arith.constant 0 : index
    %20 = vector.load %arg3[%c0_12, %c0_13] : memref<32x128xf32, #tpu.memory_space<vmem>>, vector<32x128xf32>
    %c0_14 = arith.constant 0 : index
    %c0_15 = arith.constant 0 : index
    %21 = vector.load %arg4[%c0_14, %c0_15] : memref<1x128xf32, #tpu.memory_space<vmem>>, vector<1x128xf32>
    %cst_16 = arith.constant dense<0.000000e+00> : vector<64x128xf32>
    %22 = tpu.matmul %19, %20, %cst_16 {dimension_numbers = #tpu.dot_dimension_numbers<[1], [0], [0], [1], [0, 0, 1, 1], [], []>} : vector<64x32xf32>, vector<32x128xf32>, vector<64x128xf32> -> vector<64x128xf32>
    %23 = vector.broadcast %21 : vector<1x128xf32> to vector<64x128xf32>
    %24 = arith.addf %22, %23 : vector<64x128xf32>
    %cst_17 = arith.constant dense<0.000000e+00> : vector<64x128xf32>
    %25 = tpu.matmul %17, %24, %cst_17 {dimension_numbers = #tpu.dot_dimension_numbers<[1], [0], [0], [1], [0, 0, 1, 1], [], []>} : vector<64x64xf32>, vector<64x128xf32>, vector<64x128xf32> -> vector<64x128xf32>
    %cst_18 = arith.constant 0.000000e+00 : f32
    %26 = vector.broadcast %cst_18 : f32 to vector<64x128xf32>
    %27 = arith.maximumf %25, %26 : vector<64x128xf32>
    %c0_19 = arith.constant 0 : index
    %c0_20 = arith.constant 0 : index
    %28 = vector.load %arg5[%c0_19, %c0_20] : memref<128x128xf32, #tpu.memory_space<vmem>>, vector<128x128xf32>
    %c0_21 = arith.constant 0 : index
    %c0_22 = arith.constant 0 : index
    %29 = vector.load %arg6[%c0_21, %c0_22] : memref<1x128xf32, #tpu.memory_space<vmem>>, vector<1x128xf32>
    %cst_23 = arith.constant dense<0.000000e+00> : vector<64x128xf32>
    %30 = tpu.matmul %27, %28, %cst_23 {dimension_numbers = #tpu.dot_dimension_numbers<[1], [0], [0], [1], [0, 0, 1, 1], [], []>} : vector<64x128xf32>, vector<128x128xf32>, vector<64x128xf32> -> vector<64x128xf32>
    %31 = vector.broadcast %29 : vector<1x128xf32> to vector<64x128xf32>
    %32 = arith.addf %30, %31 : vector<64x128xf32>
    %cst_24 = arith.constant dense<0.000000e+00> : vector<64x128xf32>
    %33 = tpu.matmul %17, %32, %cst_24 {dimension_numbers = #tpu.dot_dimension_numbers<[1], [0], [0], [1], [0, 0, 1, 1], [], []>} : vector<64x64xf32>, vector<64x128xf32>, vector<64x128xf32> -> vector<64x128xf32>
    %c0_25 = arith.constant 0 : index
    %c0_26 = arith.constant 0 : index
    %34 = vector.load %arg8[%c0_25, %c0_26] : memref<64x128xf32, #tpu.memory_space<vmem>>, vector<64x128xf32>
    tpu.vector_store %arg8[%c0_25, %c0_26], %33 {strides = array<i32>} : memref<64x128xf32, #tpu.memory_space<vmem>>, vector<64x128xf32>,
    return
  }
}

</mosaic_0001>

<llo_original>
// kernel: tpu_custom_call.1
$region0: #{tpu_custom_call.1}
  #allocation0 [shape = 'u32[]', space=smem, size = 0x4, offset = 0x4, fixed_abs, tag = 'smem constant byte address 0x4 - core index']
  #allocation1 [shape = 'u32[144,128]{1,0:T(1,128)}', space=vmem, size = 0x12000, scoped, tag = 'internal scratch']
  %s0 = inlined_call_operand.vmem [shape: f32[64,32], index: 0, kind: input, shape index: {}]
  %s1 = inlined_call_operand.vmem [shape: f32[32,128], index: 1, kind: input, shape index: {}]
  %s2 = inlined_call_operand.vmem [shape: f32[64,32], index: 2, kind: input, shape index: {}]
  %s3 = inlined_call_operand.vmem [shape: f32[32,128], index: 3, kind: input, shape index: {}]
  %s4 = inlined_call_operand.vmem [shape: f32[1,128], index: 4, kind: input, shape index: {}]
  %s5 = inlined_call_operand.vmem [shape: f32[128,128], index: 5, kind: input, shape index: {}]
  %s6 = inlined_call_operand.vmem [shape: f32[1,128], index: 6, kind: input, shape index: {}]
  %s7 = inlined_call_operand.hbm [shape: f32[64,64], index: 7, kind: output, shape index: {0}]
  %s8 = inlined_call_operand.hbm [shape: f32[64,128], index: 8, kind: output, shape index: {1}]
  %9 = xla_tuple %s7, %s8
  %s10 = sld [smem:[#allocation0]]
  $region46: #{tpu_custom_call.1} parent=0
    _
  %s12 = ssub.s32 1, %s10
  %s13 = scalar_select 0, %s12, %s10
  $region1: #{tpu_custom_call.1} parent=0
    #allocation2 [shape = 'u8[32768]{0}', space=vmem, size = 0x8000, scoped, tag = 'output window, operand 0, single buffered']
    #allocation3 [shape = 's32[1]{0}', space=sflag, size = 0x4, scoped, tag = 'scoped memory for tpu_custom_call.1']
    #allocation4 [shape = 'u8[32768]{0}', space=vmem, size = 0x8000, scoped, tag = 'output window, operand 1, single buffered']
    #allocation5 [shape = 's32[1]{0}', space=sflag, size = 0x4, scoped, tag = 'scoped memory for tpu_custom_call.1']
    %14 = vsyncpa [#allocation3], 0
    %15 = vsyncpa [#allocation5], 0
    // Predicated region
    $region2: #{tpu_custom_call.1} parent=1 // pred_check
      _
    $region3: #{tpu_custom_call.1} parent=1 // pred_check_branch
      %17 = sbr.rel (0) target = $region5
    $region4: #{tpu_custom_call.1} parent=1 // pred_region
      _
    $region5: #{tpu_custom_call.1} parent=1 // pred_fallthru
      _
    // Predicated region
    $region6: #{tpu_custom_call.1} parent=1 // pred_check
      _
    $region7: #{tpu_custom_call.1} parent=1 // pred_check_branch
      %19 = sbr.rel (0) target = $region9
    $region8: #{tpu_custom_call.1} parent=1 // pred_region
      _
    $region9: #{tpu_custom_call.1} parent=1 // pred_fallthru
      _
    // Predicated region
    $region10: #{tpu_custom_call.1} parent=1 // pred_check
      _
    $region11: #{tpu_custom_call.1} parent=1 // pred_check_branch
      %21 = sbr.rel (0) target = $region13
    $region12: #{tpu_custom_call.1} parent=1 // pred_region
      _
    $region13: #{tpu_custom_call.1} parent=1 // pred_fallthru
      _
    // Predicated region
    $region14: #{tpu_custom_call.1} parent=1 // pred_check
      _
    $region15: #{tpu_custom_call.1} parent=1 // pred_check_branch
      %23 = sbr.rel (0) target = $region17
    $region16: #{tpu_custom_call.1} parent=1 // pred_region
      _
    $region17: #{tpu_custom_call.1} parent=1 // pred_fallthru
      _
    // Predicated region
    $region18: #{tpu_custom_call.1} parent=1 // pred_check
      _
    $region19: #{tpu_custom_call.1} parent=1 // pred_check_branch
      %25 = sbr.rel (0) target = $region21
    $region20: #{tpu_custom_call.1} parent=1 // pred_region
      _
    $region21: #{tpu_custom_call.1} parent=1 // pred_fallthru
      _
    // Predicated region
    $region22: #{tpu_custom_call.1} parent=1 // pred_check
      _
    $region23: #{tpu_custom_call.1} parent=1 // pred_check_branch
      %27 = sbr.rel (0) target = $region25
    $region24: #{tpu_custom_call.1} parent=1 // pred_region
      _
    $region25: #{tpu_custom_call.1} parent=1 // pred_fallthru
      _
    // Predicated region
    $region26: #{tpu_custom_call.1} parent=1 // pred_check
      _
    $region27: #{tpu_custom_call.1} parent=1 // pred_check_branch
      %29 = sbr.rel (0) target = $region29
    $region28: #{tpu_custom_call.1} parent=1 // pred_region
      _
    $region29: #{tpu_custom_call.1} parent=1 // pred_fallthru
      _
    %v30 = vld [vmem:[%s0] sm:$0xff]
    %v31 = vld [vmem:[%s0 + $0x8] sm:$0xff]
    %v32 = vld [vmem:[%s0 + $0x10] sm:$0xff]
    %v33 = vld [vmem:[%s0 + $0x18] sm:$0xff]
    %v34 = vld [vmem:[%s0 + $0x20] sm:$0xff]
    %v35 = vld [vmem:[%s0 + $0x28] sm:$0xff]
    %v36 = vld [vmem:[%s0 + $0x30] sm:$0xff]
    %v37 = vld [vmem:[%s0 + $0x38] sm:$0xff]
    %v38 = vld [vmem:[%s1] sm:$0xff]
    %v39 = vld [vmem:[%s1 + $0x8] sm:$0xff]
    %v40 = vld [vmem:[%s1 + $0x10] sm:$0xff]
    %v41 = vld [vmem:[%s1 + $0x18] sm:$0xff]
    %vm42 = vcmask 261120
    %v44 = vsel %vm42, %v30, 0
    %v47 = vsel %vm42, %v31, 0
    %v50 = vsel %vm42, %v32, 0
    %v53 = vsel %vm42, %v33, 0
    %v56 = vsel %vm42, %v34, 0
    %v59 = vsel %vm42, %v35, 0
    %v62 = vsel %vm42, %v36, 0
    %v65 = vsel %vm42, %v37, 0
    %67 = vmatprep.subr.mxu0 0.0
    %68 = vmatpush1.msra.mxu0 %v38
    %69 = vmatprep.subr.mxu0 0.0
    %70 = vmatpush1.msra.mxu0 %v39
    %71 = vmatprep.subr.mxu0 0.0
    %72 = vmatpush1.msra.mxu0 %v40
    %73 = vmatprep.subr.mxu0 0.0
    %74 = vmatpush1.msra.mxu0 %v41
    %75 = vmatprep.subr.mxu0 0.0
    %76 = vmatpush1.msra.mxu0 0.0
    %77 = vmatprep.subr.mxu0 0.0
    %78 = vmatpush1.msra.mxu0 0.0
    %79 = vmatprep.subr.mxu0 0.0
    %80 = vmatpush1.msra.mxu0 0.0
    %81 = vmatprep.subr.mxu0 0.0
    %82 = vmatpush1.msra.mxu0 0.0
    %83 = vmatprep.subr.mxu0 0.0
    %84 = vmatpush1.msra.mxu0 0.0
    %85 = vmatprep.subr.mxu0 0.0
    %86 = vmatpush1.msra.mxu0 0.0
    %87 = vmatprep.subr.mxu0 0.0
    %88 = vmatpush1.msra.mxu0 0.0
    %89 = vmatprep.subr.mxu0 0.0
    %90 = vmatpush1.msra.mxu0 0.0
    %91 = vmatprep.subr.mxu0 0.0
    %92 = vmatpush1.msra.mxu0 0.0
    %93 = vmatprep.subr.mxu0 0.0
    %94 = vmatpush1.msra.mxu0 0.0
    %95 = vmatprep.subr.mxu0 0.0
    %96 = vmatpush1.msra.mxu0 0.0
    %97 = vmatprep.subr.mxu0 0.0
    %98 = vmatpush1.msra.mxu0 0.0
    %99 = vmatprep.subr.mxu0 0.0
    %100 = vmatpush1.msra.mxu0 0.0
    %101 = vmatprep.subr.mxu0 0.0
    %102 = vmatpush1.msra.mxu0 0.0
    %103 = vmatprep.subr.mxu0 0.0
    %104 = vmatpush1.msra.mxu0 0.0
    %105 = vmatprep.subr.mxu0 0.0
    %106 = vmatpush1.msra.mxu0 0.0
    %107 = vmatprep.subr.mxu0 0.0
    %108 = vmatpush1.msra.mxu0 0.0
    %109 = vmatprep.subr.mxu0 0.0
    %110 = vmatpush1.msra.mxu0 0.0
    %111 = vmatprep.subr.mxu0 0.0
    %112 = vmatpush1.msra.mxu0 0.0
    %113 = vmatprep.subr.mxu0 0.0
    %114 = vmatpush1.msra.mxu0 0.0
    %115 = vmatprep.subr.mxu0 0.0
    %116 = vmatpush1.msra.mxu0 0.0
    %117 = vmatprep.subr.mxu0 0.0
    %118 = vmatpush1.msra.mxu0 0.0
    %119 = vmatprep.subr.mxu0 0.0
    %120 = vmatpush1.msra.mxu0 0.0
    %121 = vmatprep.subr.mxu0 0.0
    %122 = vmatpush1.msra.mxu0 0.0
    %123 = vmatprep.subr.mxu0 0.0
    %124 = vmatpush1.msra.mxu0 0.0
    %125 = vmatprep.subr.mxu0 0.0
    %126 = vmatpush1.msra.mxu0 0.0
    %127 = vmatprep.subr.mxu0 0.0
    %128 = vmatpush1.msra.mxu0 0.0
    %129 = vmatprep.subr.mxu0 0.0
    %130 = vmatpush1.msra.mxu0 0.0
    %131 = vmatprep.mubr.f32.mxu0 0.0
    %132 = vmatmul.mubr.f32.gmra.mrb[0].mxu0 %v44
    %v133 = vpop.f32.mrb[0].mxu0
    %v134 = vadd.f32 0.0, %v133
    %v135 = vpop.f32.mrb[0].mxu0
    %136 = vmatprep.mubr.f32.mxu0 0.0
    %137 = vmatmul.mubr.f32.gmra.mrb[0].mxu0 %v47
    %v138 = vpop.f32.mrb[0].mxu0
    %v139 = vadd.f32 0.0, %v138
    %v140 = vpop.f32.mrb[0].mxu0
    %141 = vmatprep.mubr.f32.mxu0 0.0
    %142 = vmatmul.mubr.f32.gmra.mrb[0].mxu0 %v50
    %v143 = vpop.f32.mrb[0].mxu0
    %v144 = vadd.f32 0.0, %v143
    %v145 = vpop.f32.mrb[0].mxu0
    %146 = vmatprep.mubr.f32.mxu0 0.0
    %147 = vmatmul.mubr.f32.gmra.mrb[0].mxu0 %v53
    %v148 = vpop.f32.mrb[0].mxu0
    %v149 = vadd.f32 0.0, %v148
    %v150 = vpop.f32.mrb[0].mxu0
    %151 = vmatprep.mubr.f32.mxu0 0.0
    %152 = vmatmul.mubr.f32.gmra.mrb[0].mxu0 %v56
    %v153 = vpop.f32.mrb[0].mxu0
    %v154 = vadd.f32 0.0, %v153
    %v155 = vpop.f32.mrb[0].mxu0
    %156 = vmatprep.mubr.f32.mxu0 0.0
    %157 = vmatmul.mubr.f32.gmra.mrb[0].mxu0 %v59
    %v158 = vpop.f32.mrb[0].mxu0
    %v159 = vadd.f32 0.0, %v158
    %v160 = vpop.f32.mrb[0].mxu0
    %161 = vmatprep.mubr.f32.mxu0 0.0
    %162 = vmatmul.mubr.f32.gmra.mrb[0].mxu0 %v62
    %v163 = vpop.f32.mrb[0].mxu0
    %v164 = vadd.f32 0.0, %v163
    %v165 = vpop.f32.mrb[0].mxu0
    %166 = vmatprep.mubr.f32.mxu0 0.0
    %167 = vmatmul.mubr.f32.gmra.mrb[0].mxu0 %v65
    %v168 = vpop.f32.mrb[0].mxu0
    %v169 = vadd.f32 0.0, %v168
    %v170 = vpop.f32.mrb[0].mxu0
    %171 = vdwg.mxu0
    %v172 = vmax.f32 %v134, 0.0
    %v173 = vmax.f32 %v139, 0.0
    %v174 = vmax.f32 %v144, 0.0
    %v175 = vmax.f32 %v149, 0.0
    %v176 = vmax.f32 %v154, 0.0
    %v177 = vmax.f32 %v159, 0.0
    %v178 = vmax.f32 %v164, 0.0
    %v179 = vmax.f32 %v169, 0.0
    %180 = vmatprep.subr.mxu0 0.0
    %181 = vmatpush1.xpose.msra.mxu0 %v172
    %182 = vmatprep.subr.mxu0 0.0
    %183 = vmatpush1.xpose.msra.mxu0 %v173
    %184 = vmatprep.subr.mxu0 0.0
    %185 = vmatpush1.xpose.msra.mxu0 %v174
    %186 = vmatprep.subr.mxu0 0.0
    %187 = vmatpush1.xpose.msra.mxu0 %v175
    %188 = vmatprep.subr.mxu0 0.0
    %189 = vmatpush1.xpose.msra.mxu0 %v176
    %190 = vmatprep.subr.mxu0 0.0
    %191 = vmatpush1.xpose.msra.mxu0 %v177
    %192 = vmatprep.subr.mxu0 0.0
    %193 = vmatpush1.xpose.msra.mxu0 %v178
    %194 = vmatprep.subr.mxu0 0.0
    %195 = vmatpush1.xpose.msra.mxu0 %v179
    %196 = vmatprep.subr.mxu0 0.0
    %197 = vmatpush1.xpose.msra.mxu0 0.0
    %198 = vmatprep.subr.mxu0 0.0
    %199 = vmatpush1.xpose.msra.mxu0 0.0
    %200 = vmatprep.subr.mxu0 0.0
    %201 = vmatpush1.xpose.msra.mxu0 0.0
    %202 = vmatprep.subr.mxu0 0.0
    %203 = vmatpush1.xpose.msra.mxu0 0.0
    %204 = vmatprep.subr.mxu0 0.0
    %205 = vmatpush1.xpose.msra.mxu0 0.0
    %206 = vmatprep.subr.mxu0 0.0
    %207 = vmatpush1.xpose.msra.mxu0 0.0
    %208 = vmatprep.subr.mxu0 0.0
    %209 = vmatpush1.xpose.msra.mxu0 0.0
    %210 = vmatprep.subr.mxu0 0.0
    %211 = vmatpush1.xpose.msra.mxu0 0.0
    %212 = vmatprep.subr.mxu0 0.0
    %213 = vmatpush1.xpose.msra.mxu0 0.0
    %214 = vmatprep.subr.mxu0 0.0
    %215 = vmatpush1.xpose.msra.mxu0 0.0
    %216 = vmatprep.subr.mxu0 0.0
    %217 = vmatpush1.xpose.msra.mxu0 0.0
    %218 = vmatprep.subr.mxu0 0.0
    %219 = vmatpush1.xpose.msra.mxu0 0.0
    %220 = vmatprep.subr.mxu0 0.0
    %221 = vmatpush1.xpose.msra.mxu0 0.0
    %222 = vmatprep.subr.mxu0 0.0
    %223 = vmatpush1.xpose.msra.mxu0 0.0
    %224 = vmatprep.subr.mxu0 0.0
    %225 = vmatpush1.xpose.msra.mxu0 0.0
    %226 = vmatprep.subr.mxu0 0.0
    %227 = vmatpush1.xpose.msra.mxu0 0.0
    %228 = vmatprep.subr.mxu0 0.0
    %229 = vmatpush1.xpose.msra.mxu0 0.0
    %230 = vmatprep.subr.mxu0 0.0
    %231 = vmatpush1.xpose.msra.mxu0 0.0
    %232 = vmatprep.subr.mxu0 0.0
    %233 = vmatpush1.xpose.msra.mxu0 0.0
    %234 = vmatprep.subr.mxu0 0.0
    %235 = vmatpush1.xpose.msra.mxu0 0.0
    %236 = vmatprep.subr.mxu0 0.0
    %237 = vmatpush1.xpose.msra.mxu0 0.0
    %238 = vmatprep.subr.mxu0 0.0
    %239 = vmatpush1.xpose.msra.mxu0 0.0
    %240 = vmatprep.subr.mxu0 0.0
    %241 = vmatpush1.xpose.msra.mxu0 0.0
    %242 = vmatprep.subr.mxu0 0.0
    %243 = vmatpush1.xpose.msra.mxu0 0.0
    %244 = vmatprep.mubr.f32.mxu0 0.0
    %245 = vmatmul.mubr.f32.gmra.mrb[0].mxu0 %v172
    %v246 = vpop.f32.mrb[0].mxu0
    %v247 = vadd.f32 0.0, %v246
    %v248 = vpop.f32.mrb[0].mxu0
    %249 = vmatprep.mubr.f32.mxu0 0.0
    %250 = vmatmul.mubr.f32.gmra.mrb[0].mxu0 %v173
    %v251 = vpop.f32.mrb[0].mxu0
    %v252 = vadd.f32 0.0, %v251
    %v253 = vpop.f32.mrb[0].mxu0
    %254 = vmatprep.mubr.f32.mxu0 0.0
    %255 = vmatmul.mubr.f32.gmra.mrb[0].mxu0 %v174
    %v256 = vpop.f32.mrb[0].mxu0
    %v257 = vadd.f32 0.0, %v256
    %v258 = vpop.f32.mrb[0].mxu0
    %259 = vmatprep.mubr.f32.mxu0 0.0
    %260 = vmatmul.mubr.f32.gmra.mrb[0].mxu0 %v175
    %v261 = vpop.f32.mrb[0].mxu0
    %v262 = vadd.f32 0.0, %v261
    %v263 = vpop.f32.mrb[0].mxu0
    %264 = vmatprep.mubr.f32.mxu0 0.0
    %265 = vmatmul.mubr.f32.gmra.mrb[0].mxu0 %v176
    %v266 = vpop.f32.mrb[0].mxu0
    %v267 = vadd.f32 0.0, %v266
    %v268 = vpop.f32.mrb[0].mxu0
    %269 = vmatprep.mubr.f32.mxu0 0.0
    %270 = vmatmul.mubr.f32.gmra.mrb[0].mxu0 %v177
    %v271 = vpop.f32.mrb[0].mxu0
    %v272 = vadd.f32 0.0, %v271
    %v273 = vpop.f32.mrb[0].mxu0
    %274 = vmatprep.mubr.f32.mxu0 0.0
    %275 = vmatmul.mubr.f32.gmra.mrb[0].mxu0 %v178
    %v276 = vpop.f32.mrb[0].mxu0
    %v277 = vadd.f32 0.0, %v276
    %v278 = vpop.f32.mrb[0].mxu0
    %279 = vmatprep.mubr.f32.mxu0 0.0
    %280 = vmatmul.mubr.f32.gmra.mrb[0].mxu0 %v179
    %v281 = vpop.f32.mrb[0].mxu0
    %v282 = vadd.f32 0.0, %v281
    %v283 = vpop.f32.mrb[0].mxu0
    %284 = vdwg.mxu0
    %v285 = vmul.f32 %v247, 0.25
    %v286 = vmul.f32 %v252, 0.25
    %v287 = vmul.f32 %v257, 0.25
    %v288 = vmul.f32 %v262, 0.25
    %v289 = vmul.f32 %v267, 0.25
    %v290 = vmul.f32 %v272, 0.25
    %v291 = vmul.f32 %v277, 0.25
    %v292 = vmul.f32 %v282, 0.25
    %vm293 = vcmask 523264
    %v294 = vsel %vm293, %v285, -inf
    %295 = vmax.xlane.f32.xlu0 %v294
    %v296 = vpop.xlane.xlu0 %295
    %v297 = vsel %vm293, %v286, -inf
    %298 = vmax.xlane.f32.xlu0 %v297
    %v299 = vpop.xlane.xlu0 %298
    %v300 = vsel %vm293, %v287, -inf
    %301 = vmax.xlane.f32.xlu0 %v300
    %v302 = vpop.xlane.xlu0 %301
    %v303 = vsel %vm293, %v288, -inf
    %304 = vmax.xlane.f32.xlu0 %v303
    %v305 = vpop.xlane.xlu0 %304
    %v306 = vsel %vm293, %v289, -inf
    %307 = vmax.xlane.f32.xlu0 %v306
    %v308 = vpop.xlane.xlu0 %307
    %v309 = vsel %vm293, %v290, -inf
    %310 = vmax.xlane.f32.xlu0 %v309
    %v311 = vpop.xlane.xlu0 %310
    %v312 = vsel %vm293, %v291, -inf
    %313 = vmax.xlane.f32.xlu0 %v312
    %v314 = vpop.xlane.xlu0 %313
    %v315 = vsel %vm293, %v292, -inf
    %316 = vmax.xlane.f32.xlu0 %v315
    %v317 = vpop.xlane.xlu0 %316
    %v318 = vsub.f32 %v285, %v296
    %v319 = vsub.f32 %v286, %v299
    %v320 = vsub.f32 %v287, %v302
    %v321 = vsub.f32 %v288, %v305
    %v322 = vsub.f32 %v289, %v308
    %v323 = vsub.f32 %v290, %v311
    %v324 = vsub.f32 %v291, %v314
    %v325 = vsub.f32 %v292, %v317
    %v326 = vmul.f32 %v318, 1.442695
    %v327 = vpow.pop %v326
    %v328 = vmul.f32 %v319, 1.442695
    %v329 = vpow.pop %v328
    %v330 = vmul.f32 %v320, 1.442695
    %v331 = vpow.pop %v330
    %v332 = vmul.f32 %v321, 1.442695
    %v333 = vpow.pop %v332
    %v334 = vmul.f32 %v322, 1.442695
    %v335 = vpow.pop %v334
    %v336 = vmul.f32 %v323, 1.442695
    %v337 = vpow.pop %v336
    %v338 = vmul.f32 %v324, 1.442695
    %v339 = vpow.pop %v338
    %v340 = vmul.f32 %v325, 1.442695
    %v341 = vpow.pop %v340
    %v342 = vsel %vm293, %v327, 0.0
    %343 = vadd.xlane.f32.xlu0 %v342
    %v344 = vpop.xlane.xlu0 %343
    %v345 = vsel %vm293, %v329, 0.0
    %346 = vadd.xlane.f32.xlu0 %v345
    %v347 = vpop.xlane.xlu0 %346
    %v348 = vsel %vm293, %v331, 0.0
    %349 = vadd.xlane.f32.xlu0 %v348
    %v350 = vpop.xlane.xlu0 %349
    %v351 = vsel %vm293, %v333, 0.0
    %352 = vadd.xlane.f32.xlu0 %v351
    %v353 = vpop.xlane.xlu0 %352
    %v354 = vsel %vm293, %v335, 0.0
    %355 = vadd.xlane.f32.xlu0 %v354
    %v356 = vpop.xlane.xlu0 %355
    %v357 = vsel %vm293, %v337, 0.0
    %358 = vadd.xlane.f32.xlu0 %v357
    %v359 = vpop.xlane.xlu0 %358
    %v360 = vsel %vm293, %v339, 0.0
    %361 = vadd.xlane.f32.xlu0 %v360
    %v362 = vpop.xlane.xlu0 %361
    %v363 = vsel %vm293, %v341, 0.0
    %364 = vadd.xlane.f32.xlu0 %v363
    %v365 = vpop.xlane.xlu0 %364
    %v366 = vrcp.pop %v344
    %v367 = vrcp.pop %v347
    %v368 = vrcp.pop %v350
    %v369 = vrcp.pop %v353
    %v370 = vrcp.pop %v356
    %v371 = vrcp.pop %v359
    %v372 = vrcp.pop %v362
    %v373 = vrcp.pop %v365
    %v374 = vmul.f32 %v327, %v366
    %v375 = vmul.f32 %v329, %v367
    %v376 = vmul.f32 %v331, %v368
    %v377 = vmul.f32 %v333, %v369
    %v378 = vmul.f32 %v335, %v370
    %v379 = vmul.f32 %v337, %v371
    %v380 = vmul.f32 %v339, %v372
    %v381 = vmul.f32 %v341, %v373
    %382 = vst.msk [vmem:[#allocation2] sm:$0xff] %vm293, %v374
    %383 = vst.msk [vmem:[#allocation2 + $0x8] sm:$0xff] %vm293, %v375
    %384 = vst.msk [vmem:[#allocation2 + $0x10] sm:$0xff] %vm293, %v376
    %385 = vst.msk [vmem:[#allocation2 + $0x18] sm:$0xff] %vm293, %v377
    %386 = vst.msk [vmem:[#allocation2 + $0x20] sm:$0xff] %vm293, %v378
    %387 = vst.msk [vmem:[#allocation2 + $0x28] sm:$0xff] %vm293, %v379
    %388 = vst.msk [vmem:[#allocation2 + $0x30] sm:$0xff] %vm293, %v380
    %389 = vst.msk [vmem:[#allocation2 + $0x38] sm:$0xff] %vm293, %v381
    %v390 = vld [vmem:[%s2] sm:$0xff]
    %v391 = vld [vmem:[%s2 + $0x8] sm:$0xff]
    %v392 = vld [vmem:[%s2 + $0x10] sm:$0xff]
    %v393 = vld [vmem:[%s2 + $0x18] sm:$0xff]
    %v394 = vld [vmem:[%s2 + $0x20] sm:$0xff]
    %v395 = vld [vmem:[%s2 + $0x28] sm:$0xff]
    %v396 = vld [vmem:[%s2 + $0x30] sm:$0xff]
    %v397 = vld [vmem:[%s2 + $0x38] sm:$0xff]
    %v398 = vld [vmem:[%s3] sm:$0xff]
    %v399 = vld [vmem:[%s3 + $0x8] sm:$0xff]
    %v400 = vld [vmem:[%s3 + $0x10] sm:$0xff]
    %v401 = vld [vmem:[%s3 + $0x18] sm:$0xff]
    %v402 = vld [vmem:[%s4] sm:$0x1]
    %v404 = vlaneseq
    %v405 = vshrl.u32 %v404, 7
    %v406 = vsub.s32 0, %v405
    %v407 = vrot.slane %v402, %v406
    %v410 = vsel %vm42, %v390, 0
    %v413 = vsel %vm42, %v391, 0
    %v416 = vsel %vm42, %v392, 0
    %v419 = vsel %vm42, %v393, 0
    %v422 = vsel %vm42, %v394, 0
    %v425 = vsel %vm42, %v395, 0
    %v428 = vsel %vm42, %v396, 0
    %v431 = vsel %vm42, %v397, 0
    %433 = vmatprep.subr.mxu0 0.0
    %434 = vmatpush1.msra.mxu0 %v398
    %435 = vmatprep.subr.mxu0 0.0
    %436 = vmatpush1.msra.mxu0 %v399
    %437 = vmatprep.subr.mxu0 0.0
    %438 = vmatpush1.msra.mxu0 %v400
    %439 = vmatprep.subr.mxu0 0.0
    %440 = vmatpush1.msra.mxu0 %v401
    %441 = vmatprep.subr.mxu0 0.0
    %442 = vmatpush1.msra.mxu0 0.0
    %443 = vmatprep.subr.mxu0 0.0
    %444 = vmatpush1.msra.mxu0 0.0
    %445 = vmatprep.subr.mxu0 0.0
    %446 = vmatpush1.msra.mxu0 0.0
    %447 = vmatprep.subr.mxu0 0.0
    %448 = vmatpush1.msra.mxu0 0.0
    %449 = vmatprep.subr.mxu0 0.0
    %450 = vmatpush1.msra.mxu0 0.0
    %451 = vmatprep.subr.mxu0 0.0
    %452 = vmatpush1.msra.mxu0 0.0
    %453 = vmatprep.subr.mxu0 0.0
    %454 = vmatpush1.msra.mxu0 0.0
    %455 = vmatprep.subr.mxu0 0.0
    %456 = vmatpush1.msra.mxu0 0.0
    %457 = vmatprep.subr.mxu0 0.0
    %458 = vmatpush1.msra.mxu0 0.0
    %459 = vmatprep.subr.mxu0 0.0
    %460 = vmatpush1.msra.mxu0 0.0
    %461 = vmatprep.subr.mxu0 0.0
    %462 = vmatpush1.msra.mxu0 0.0
    %463 = vmatprep.subr.mxu0 0.0
    %464 = vmatpush1.msra.mxu0 0.0
    %465 = vmatprep.subr.mxu0 0.0
    %466 = vmatpush1.msra.mxu0 0.0
    %467 = vmatprep.subr.mxu0 0.0
    %468 = vmatpush1.msra.mxu0 0.0
    %469 = vmatprep.subr.mxu0 0.0
    %470 = vmatpush1.msra.mxu0 0.0
    %471 = vmatprep.subr.mxu0 0.0
    %472 = vmatpush1.msra.mxu0 0.0
    %473 = vmatprep.subr.mxu0 0.0
    %474 = vmatpush1.msra.mxu0 0.0
    %475 = vmatprep.subr.mxu0 0.0
    %476 = vmatpush1.msra.mxu0 0.0
    %477 = vmatprep.subr.mxu0 0.0
    %478 = vmatpush1.msra.mxu0 0.0
    %479 = vmatprep.subr.mxu0 0.0
    %480 = vmatpush1.msra.mxu0 0.0
    %481 = vmatprep.subr.mxu0 0.0
    %482 = vmatpush1.msra.mxu0 0.0
    %483 = vmatprep.subr.mxu0 0.0
    %484 = vmatpush1.msra.mxu0 0.0
    %485 = vmatprep.subr.mxu0 0.0
    %486 = vmatpush1.msra.mxu0 0.0
    %487 = vmatprep.subr.mxu0 0.0
    %488 = vmatpush1.msra.mxu0 0.0
    %489 = vmatprep.subr.mxu0 0.0
    %490 = vmatpush1.msra.mxu0 0.0
    %491 = vmatprep.subr.mxu0 0.0
    %492 = vmatpush1.msra.mxu0 0.0
    %493 = vmatprep.subr.mxu0 0.0
    %494 = vmatpush1.msra.mxu0 0.0
    %495 = vmatprep.subr.mxu0 0.0
    %496 = vmatpush1.msra.mxu0 0.0
    %497 = vmatprep.mubr.f32.mxu0 0.0
    %498 = vmatmul.mubr.f32.gmra.mrb[0].mxu0 %v410
    %v499 = vpop.f32.mrb[0].mxu0
    %v500 = vadd.f32 %v407, %v499
    %v501 = vpop.f32.mrb[0].mxu0
    %502 = vmatprep.mubr.f32.mxu0 0.0
    %503 = vmatmul.mubr.f32.gmra.mrb[0].mxu0 %v413
    %v504 = vpop.f32.mrb[0].mxu0
    %v505 = vadd.f32 %v407, %v504
    %v506 = vpop.f32.mrb[0].mxu0
    %507 = vmatprep.mubr.f32.mxu0 0.0
    %508 = vmatmul.mubr.f32.gmra.mrb[0].mxu0 %v416
    %v509 = vpop.f32.mrb[0].mxu0
    %v510 = vadd.f32 %v407, %v509
    %v511 = vpop.f32.mrb[0].mxu0
    %512 = vmatprep.mubr.f32.mxu0 0.0
    %513 = vmatmul.mubr.f32.gmra.mrb[0].mxu0 %v419
    %v514 = vpop.f32.mrb[0].mxu0
    %v515 = vadd.f32 %v407, %v514
    %v516 = vpop.f32.mrb[0].mxu0
    %517 = vmatprep.mubr.f32.mxu0 0.0
    %518 = vmatmul.mubr.f32.gmra.mrb[0].mxu0 %v422
    %v519 = vpop.f32.mrb[0].mxu0
    %v520 = vadd.f32 %v407, %v519
    %v521 = vpop.f32.mrb[0].mxu0
    %522 = vmatprep.mubr.f32.mxu0 0.0
    %523 = vmatmul.mubr.f32.gmra.mrb[0].mxu0 %v425
    %v524 = vpop.f32.mrb[0].mxu0
    %v525 = vadd.f32 %v407, %v524
    %v526 = vpop.f32.mrb[0].mxu0
    %527 = vmatprep.mubr.f32.mxu0 0.0
    %528 = vmatmul.mubr.f32.gmra.mrb[0].mxu0 %v428
    %v529 = vpop.f32.mrb[0].mxu0
    %v530 = vadd.f32 %v407, %v529
    %v531 = vpop.f32.mrb[0].mxu0
    %532 = vmatprep.mubr.f32.mxu0 0.0
    %533 = vmatmul.mubr.f32.gmra.mrb[0].mxu0 %v431
    %v534 = vpop.f32.mrb[0].mxu0
    %v535 = vadd.f32 %v407, %v534
    %v536 = vpop.f32.mrb[0].mxu0
    %537 = vdwg.mxu0
    %v539 = vsel %vm293, %v374, 0
    %v542 = vsel %vm293, %v375, 0
    %v545 = vsel %vm293, %v376, 0
    %v548 = vsel %vm293, %v377, 0
    %v551 = vsel %vm293, %v378, 0
    %v554 = vsel %vm293, %v379, 0
    %v557 = vsel %vm293, %v380, 0
    %v560 = vsel %vm293, %v381, 0
    %562 = vmatprep.subr.mxu0 0.0
    %563 = vmatpush1.msra.mxu0 %v500
    %564 = vmatprep.subr.mxu0 0.0
    %565 = vmatpush1.msra.mxu0 %v505
    %566 = vmatprep.subr.mxu0 0.0
    %567 = vmatpush1.msra.mxu0 %v510
    %568 = vmatprep.subr.mxu0 0.0
    %569 = vmatpush1.msra.mxu0 %v515
    %570 = vmatprep.subr.mxu0 0.0
    %571 = vmatpush1.msra.mxu0 %v520
    %572 = vmatprep.subr.mxu0 0.0
    %573 = vmatpush1.msra.mxu0 %v525
    %574 = vmatprep.subr.mxu0 0.0
    %575 = vmatpush1.msra.mxu0 %v530
    %576 = vmatprep.subr.mxu0 0.0
    %577 = vmatpush1.msra.mxu0 %v535
    %578 = vmatprep.subr.mxu0 0.0
    %579 = vmatpush1.msra.mxu0 0.0
    %580 = vmatprep.subr.mxu0 0.0
    %581 = vmatpush1.msra.mxu0 0.0
    %582 = vmatprep.subr.mxu0 0.0
    %583 = vmatpush1.msra.mxu0 0.0
    %584 = vmatprep.subr.mxu0 0.0
    %585 = vmatpush1.msra.mxu0 0.0
    %586 = vmatprep.subr.mxu0 0.0
    %587 = vmatpush1.msra.mxu0 0.0
    %588 = vmatprep.subr.mxu0 0.0
    %589 = vmatpush1.msra.mxu0 0.0
    %590 = vmatprep.subr.mxu0 0.0
    %591 = vmatpush1.msra.mxu0 0.0
    %592 = vmatprep.subr.mxu0 0.0
    %593 = vmatpush1.msra.mxu0 0.0
    %594 = vmatprep.subr.mxu0 0.0
    %595 = vmatpush1.msra.mxu0 0.0
    %596 = vmatprep.subr.mxu0 0.0
    %597 = vmatpush1.msra.mxu0 0.0
    %598 = vmatprep.subr.mxu0 0.0
    %599 = vmatpush1.msra.mxu0 0.0
    %600 = vmatprep.subr.mxu0 0.0
    %601 = vmatpush1.msra.mxu0 0.0
    %602 = vmatprep.subr.mxu0 0.0
    %603 = vmatpush1.msra.mxu0 0.0
    %604 = vmatprep.subr.mxu0 0.0
    %605 = vmatpush1.msra.mxu0 0.0
    %606 = vmatprep.subr.mxu0 0.0
    %607 = vmatpush1.msra.mxu0 0.0
    %608 = vmatprep.subr.mxu0 0.0
    %609 = vmatpush1.msra.mxu0 0.0
    %610 = vmatprep.subr.mxu0 0.0
    %611 = vmatpush1.msra.mxu0 0.0
    %612 = vmatprep.subr.mxu0 0.0
    %613 = vmatpush1.msra.mxu0 0.0
    %614 = vmatprep.subr.mxu0 0.0
    %615 = vmatpush1.msra.mxu0 0.0
    %616 = vmatprep.subr.mxu0 0.0
    %617 = vmatpush1.msra.mxu0 0.0
    %618 = vmatprep.subr.mxu0 0.0
    %619 = vmatpush1.msra.mxu0 0.0
    %620 = vmatprep.subr.mxu0 0.0
    %621 = vmatpush1.msra.mxu0 0.0
    %622 = vmatprep.subr.mxu0 0.0
    %623 = vmatpush1.msra.mxu0 0.0
    %624 = vmatprep.subr.mxu0 0.0
    %625 = vmatpush1.msra.mxu0 0.0
    %626 = vmatprep.mubr.f32.mxu0 0.0
    %627 = vmatmul.mubr.f32.gmra.mrb[0].mxu0 %v539
    %v628 = vpop.f32.mrb[0].mxu0
    %v629 = vadd.f32 0.0, %v628
    %v630 = vpop.f32.mrb[0].mxu0
    %631 = vmatprep.mubr.f32.mxu0 0.0
    %632 = vmatmul.mubr.f32.gmra.mrb[0].mxu0 %v542
    %v633 = vpop.f32.mrb[0].mxu0
    %v634 = vadd.f32 0.0, %v633
    %v635 = vpop.f32.mrb[0].mxu0
    %636 = vmatprep.mubr.f32.mxu0 0.0
    %637 = vmatmul.mubr.f32.gmra.mrb[0].mxu0 %v545
    %v638 = vpop.f32.mrb[0].mxu0
    %v639 = vadd.f32 0.0, %v638
    %v640 = vpop.f32.mrb[0].mxu0
    %641 = vmatprep.mubr.f32.mxu0 0.0
    %642 = vmatmul.mubr.f32.gmra.mrb[0].mxu0 %v548
    %v643 = vpop.f32.mrb[0].mxu0
    %v644 = vadd.f32 0.0, %v643
    %v645 = vpop.f32.mrb[0].mxu0
    %646 = vmatprep.mubr.f32.mxu0 0.0
    %647 = vmatmul.mubr.f32.gmra.mrb[0].mxu0 %v551
    %v648 = vpop.f32.mrb[0].mxu0
    %v649 = vadd.f32 0.0, %v648
    %v650 = vpop.f32.mrb[0].mxu0
    %651 = vmatprep.mubr.f32.mxu0 0.0
    %652 = vmatmul.mubr.f32.gmra.mrb[0].mxu0 %v554
    %v653 = vpop.f32.mrb[0].mxu0
    %v654 = vadd.f32 0.0, %v653
    %v655 = vpop.f32.mrb[0].mxu0
    %656 = vmatprep.mubr.f32.mxu0 0.0
    %657 = vmatmul.mubr.f32.gmra.mrb[0].mxu0 %v557
    %v658 = vpop.f32.mrb[0].mxu0
    %v659 = vadd.f32 0.0, %v658
    %v660 = vpop.f32.mrb[0].mxu0
    %661 = vmatprep.mubr.f32.mxu0 0.0
    %662 = vmatmul.mubr.f32.gmra.mrb[0].mxu0 %v560
    %v663 = vpop.f32.mrb[0].mxu0
    %v664 = vadd.f32 0.0, %v663
    %v665 = vpop.f32.mrb[0].mxu0
    %666 = vdwg.mxu0
    %v667 = vmax.f32 %v629, 0.0
    %v668 = vmax.f32 %v634, 0.0
    %v669 = vmax.f32 %v639, 0.0
    %v670 = vmax.f32 %v644, 0.0
    %v671 = vmax.f32 %v649, 0.0
    %v672 = vmax.f32 %v654, 0.0
    %v673 = vmax.f32 %v659, 0.0
    %v674 = vmax.f32 %v664, 0.0
    %v675 = vld [vmem:[%s5] sm:$0xff]
    %v676 = vld [vmem:[%s5 + $0x8] sm:$0xff]
    %v677 = vld [vmem:[%s5 + $0x10] sm:$0xff]
    %v678 = vld [vmem:[%s5 + $0x18] sm:$0xff]
    %v679 = vld [vmem:[%s5 + $0x20] sm:$0xff]
    %v680 = vld [vmem:[%s5 + $0x28] sm:$0xff]
    %v681 = vld [vmem:[%s5 + $0x30] sm:$0xff]
    %v682 = vld [vmem:[%s5 + $0x38] sm:$0xff]
    %v683 = vld [vmem:[%s5 + $0x40] sm:$0xff]
    %v684 = vld [vmem:[%s5 + $0x48] sm:$0xff]
    %v685 = vld [vmem:[%s5 + $0x50] sm:$0xff]
    %v686 = vld [vmem:[%s5 + $0x58] sm:$0xff]
    %v687 = vld [vmem:[%s5 + $0x60] sm:$0xff]
    %v688 = vld [vmem:[%s5 + $0x68] sm:$0xff]
    %v689 = vld [vmem:[%s5 + $0x70] sm:$0xff]
    %v690 = vld [vmem:[%s5 + $0x78] sm:$0xff]
    %v691 = vld [vmem:[%s6] sm:$0x1]
    %v693 = vlaneseq
    %v694 = vshrl.u32 %v693, 7
    %v695 = vsub.s32 0, %v694
    %v696 = vrot.slane %v691, %v695
    %698 = vmatprep.subr.mxu0 0.0
    %699 = vmatpush1.msra.mxu0 %v675
    %700 = vmatprep.subr.mxu0 0.0
    %701 = vmatpush1.msra.mxu0 %v676
    %702 = vmatprep.subr.mxu0 0.0
    %703 = vmatpush1.msra.mxu0 %v677
    %704 = vmatprep.subr.mxu0 0.0
    %705 = vmatpush1.msra.mxu0 %v678
    %706 = vmatprep.subr.mxu0 0.0
    %707 = vmatpush1.msra.mxu0 %v679
    %708 = vmatprep.subr.mxu0 0.0
    %709 = vmatpush1.msra.mxu0 %v680
    %710 = vmatprep.subr.mxu0 0.0
    %711 = vmatpush1.msra.mxu0 %v681
    %712 = vmatprep.subr.mxu0 0.0
    %713 = vmatpush1.msra.mxu0 %v682
    %714 = vmatprep.subr.mxu0 0.0
    %715 = vmatpush1.msra.mxu0 %v683
    %716 = vmatprep.subr.mxu0 0.0
    %717 = vmatpush1.msra.mxu0 %v684
    %718 = vmatprep.subr.mxu0 0.0
    %719 = vmatpush1.msra.mxu0 %v685
    %720 = vmatprep.subr.mxu0 0.0
    %721 = vmatpush1.msra.mxu0 %v686
    %722 = vmatprep.subr.mxu0 0.0
    %723 = vmatpush1.msra.mxu0 %v687
    %724 = vmatprep.subr.mxu0 0.0
    %725 = vmatpush1.msra.mxu0 %v688
    %726 = vmatprep.subr.mxu0 0.0
    %727 = vmatpush1.msra.mxu0 %v689
    %728 = vmatprep.subr.mxu0 0.0
    %729 = vmatpush1.msra.mxu0 %v690
    %730 = vmatprep.subr.mxu0 0.0
    %731 = vmatpush1.msra.mxu0 0.0
    %732 = vmatprep.subr.mxu0 0.0
    %733 = vmatpush1.msra.mxu0 0.0
    %734 = vmatprep.subr.mxu0 0.0
    %735 = vmatpush1.msra.mxu0 0.0
    %736 = vmatprep.subr.mxu0 0.0
    %737 = vmatpush1.msra.mxu0 0.0
    %738 = vmatprep.subr.mxu0 0.0
    %739 = vmatpush1.msra.mxu0 0.0
    %740 = vmatprep.subr.mxu0 0.0
    %741 = vmatpush1.msra.mxu0 0.0
    %742 = vmatprep.subr.mxu0 0.0
    %743 = vmatpush1.msra.mxu0 0.0
    %744 = vmatprep.subr.mxu0 0.0
    %745 = vmatpush1.msra.mxu0 0.0
    %746 = vmatprep.subr.mxu0 0.0
    %747 = vmatpush1.msra.mxu0 0.0
    %748 = vmatprep.subr.mxu0 0.0
    %749 = vmatpush1.msra.mxu0 0.0
    %750 = vmatprep.subr.mxu0 0.0
    %751 = vmatpush1.msra.mxu0 0.0
    %752 = vmatprep.subr.mxu0 0.0
    %753 = vmatpush1.msra.mxu0 0.0
    %754 = vmatprep.subr.mxu0 0.0
    %755 = vmatpush1.msra.mxu0 0.0
    %756 = vmatprep.subr.mxu0 0.0
    %757 = vmatpush1.msra.mxu0 0.0
    %758 = vmatprep.subr.mxu0 0.0
    %759 = vmatpush1.msra.mxu0 0.0
    %760 = vmatprep.subr.mxu0 0.0
    %761 = vmatpush1.msra.mxu0 0.0
    %762 = vmatprep.mubr.f32.mxu0 0.0
    %763 = vmatmul.mubr.f32.gmra.mrb[0].mxu0 %v667
    %v764 = vpop.f32.mrb[0].mxu0
    %v765 = vadd.f32 %v696, %v764
    %v766 = vpop.f32.mrb[0].mxu0
    %767 = vmatprep.mubr.f32.mxu0 0.0
    %768 = vmatmul.mubr.f32.gmra.mrb[0].mxu0 %v668
    %v769 = vpop.f32.mrb[0].mxu0
    %v770 = vadd.f32 %v696, %v769
    %v771 = vpop.f32.mrb[0].mxu0
    %772 = vmatprep.mubr.f32.mxu0 0.0
    %773 = vmatmul.mubr.f32.gmra.mrb[0].mxu0 %v669
    %v774 = vpop.f32.mrb[0].mxu0
    %v775 = vadd.f32 %v696, %v774
    %v776 = vpop.f32.mrb[0].mxu0
    %777 = vmatprep.mubr.f32.mxu0 0.0
    %778 = vmatmul.mubr.f32.gmra.mrb[0].mxu0 %v670
    %v779 = vpop.f32.mrb[0].mxu0
    %v780 = vadd.f32 %v696, %v779
    %v781 = vpop.f32.mrb[0].mxu0
    %782 = vmatprep.mubr.f32.mxu0 0.0
    %783 = vmatmul.mubr.f32.gmra.mrb[0].mxu0 %v671
    %v784 = vpop.f32.mrb[0].mxu0
    %v785 = vadd.f32 %v696, %v784
    %v786 = vpop.f32.mrb[0].mxu0
    %787 = vmatprep.mubr.f32.mxu0 0.0
    %788 = vmatmul.mubr.f32.gmra.mrb[0].mxu0 %v672
    %v789 = vpop.f32.mrb[0].mxu0
    %v790 = vadd.f32 %v696, %v789
    %v791 = vpop.f32.mrb[0].mxu0
    %792 = vmatprep.mubr.f32.mxu0 0.0
    %793 = vmatmul.mubr.f32.gmra.mrb[0].mxu0 %v673
    %v794 = vpop.f32.mrb[0].mxu0
    %v795 = vadd.f32 %v696, %v794
    %v796 = vpop.f32.mrb[0].mxu0
    %797 = vmatprep.mubr.f32.mxu0 0.0
    %798 = vmatmul.mubr.f32.gmra.mrb[0].mxu0 %v674
    %v799 = vpop.f32.mrb[0].mxu0
    %v800 = vadd.f32 %v696, %v799
    %v801 = vpop.f32.mrb[0].mxu0
    %802 = vdwg.mxu0
    %803 = vmatprep.subr.mxu0 0.0
    %804 = vmatpush1.msra.mxu0 %v765
    %805 = vmatprep.subr.mxu0 0.0
    %806 = vmatpush1.msra.mxu0 %v770
    %807 = vmatprep.subr.mxu0 0.0
    %808 = vmatpush1.msra.mxu0 %v775
    %809 = vmatprep.subr.mxu0 0.0
    %810 = vmatpush1.msra.mxu0 %v780
    %811 = vmatprep.subr.mxu0 0.0
    %812 = vmatpush1.msra.mxu0 %v785
    %813 = vmatprep.subr.mxu0 0.0
    %814 = vmatpush1.msra.mxu0 %v790
    %815 = vmatprep.subr.mxu0 0.0
    %816 = vmatpush1.msra.mxu0 %v795
    %817 = vmatprep.subr.mxu0 0.0
    %818 = vmatpush1.msra.mxu0 %v800
    %819 = vmatprep.subr.mxu0 0.0
    %820 = vmatpush1.msra.mxu0 0.0
    %821 = vmatprep.subr.mxu0 0.0
    %822 = vmatpush1.msra.mxu0 0.0
    %823 = vmatprep.subr.mxu0 0.0
    %824 = vmatpush1.msra.mxu0 0.0
    %825 = vmatprep.subr.mxu0 0.0
    %826 = vmatpush1.msra.mxu0 0.0
    %827 = vmatprep.subr.mxu0 0.0
    %828 = vmatpush1.msra.mxu0 0.0
    %829 = vmatprep.subr.mxu0 0.0
    %830 = vmatpush1.msra.mxu0 0.0
    %831 = vmatprep.subr.mxu0 0.0
    %832 = vmatpush1.msra.mxu0 0.0
    %833 = vmatprep.subr.mxu0 0.0
    %834 = vmatpush1.msra.mxu0 0.0
    %835 = vmatprep.subr.mxu0 0.0
    %836 = vmatpush1.msra.mxu0 0.0
    %837 = vmatprep.subr.mxu0 0.0
    %838 = vmatpush1.msra.mxu0 0.0
    %839 = vmatprep.subr.mxu0 0.0
    %840 = vmatpush1.msra.mxu0 0.0
    %841 = vmatprep.subr.mxu0 0.0
    %842 = vmatpush1.msra.mxu0 0.0
    %843 = vmatprep.subr.mxu0 0.0
    %844 = vmatpush1.msra.mxu0 0.0
    %845 = vmatprep.subr.mxu0 0.0
    %846 = vmatpush1.msra.mxu0 0.0
    %847 = vmatprep.subr.mxu0 0.0
    %848 = vmatpush1.msra.mxu0 0.0
    %849 = vmatprep.subr.mxu0 0.0
    %850 = vmatpush1.msra.mxu0 0.0
    %851 = vmatprep.subr.mxu0 0.0
    %852 = vmatpush1.msra.mxu0 0.0
    %853 = vmatprep.subr.mxu0 0.0
    %854 = vmatpush1.msra.mxu0 0.0
    %855 = vmatprep.subr.mxu0 0.0
    %856 = vmatpush1.msra.mxu0 0.0
    %857 = vmatprep.subr.mxu0 0.0
    %858 = vmatpush1.msra.mxu0 0.0
    %859 = vmatprep.subr.mxu0 0.0
    %860 = vmatpush1.msra.mxu0 0.0
    %861 = vmatprep.subr.mxu0 0.0
    %862 = vmatpush1.msra.mxu0 0.0
    %863 = vmatprep.subr.mxu0 0.0
    %864 = vmatpush1.msra.mxu0 0.0
    %865 = vmatprep.subr.mxu0 0.0
    %866 = vmatpush1.msra.mxu0 0.0
    %867 = vmatprep.mubr.f32.mxu0 0.0
    %868 = vmatmul.mubr.f32.gmra.mrb[0].mxu0 %v539
    %v869 = vpop.f32.mrb[0].mxu0
    %v870 = vadd.f32 0.0, %v869
    %v871 = vpop.f32.mrb[0].mxu0
    %872 = vmatprep.mubr.f32.mxu0 0.0
    %873 = vmatmul.mubr.f32.gmra.mrb[0].mxu0 %v542
    %v874 = vpop.f32.mrb[0].mxu0
    %v875 = vadd.f32 0.0, %v874
    %v876 = vpop.f32.mrb[0].mxu0
    %877 = vmatprep.mubr.f32.mxu0 0.0
    %878 = vmatmul.mubr.f32.gmra.mrb[0].mxu0 %v545
    %v879 = vpop.f32.mrb[0].mxu0
    %v880 = vadd.f32 0.0, %v879
    %v881 = vpop.f32.mrb[0].mxu0
    %882 = vmatprep.mubr.f32.mxu0 0.0
    %883 = vmatmul.mubr.f32.gmra.mrb[0].mxu0 %v548
    %v884 = vpop.f32.mrb[0].mxu0
    %v885 = vadd.f32 0.0, %v884
    %v886 = vpop.f32.mrb[0].mxu0
    %887 = vmatprep.mubr.f32.mxu0 0.0
    %888 = vmatmul.mubr.f32.gmra.mrb[0].mxu0 %v551
    %v889 = vpop.f32.mrb[0].mxu0
    %v890 = vadd.f32 0.0, %v889
    %v891 = vpop.f32.mrb[0].mxu0
    %892 = vmatprep.mubr.f32.mxu0 0.0
    %893 = vmatmul.mubr.f32.gmra.mrb[0].mxu0 %v554
    %v894 = vpop.f32.mrb[0].mxu0
    %v895 = vadd.f32 0.0, %v894
    %v896 = vpop.f32.mrb[0].mxu0
    %897 = vmatprep.mubr.f32.mxu0 0.0
    %898 = vmatmul.mubr.f32.gmra.mrb[0].mxu0 %v557
    %v899 = vpop.f32.mrb[0].mxu0
    %v900 = vadd.f32 0.0, %v899
    %v901 = vpop.f32.mrb[0].mxu0
    %902 = vmatprep.mubr.f32.mxu0 0.0
    %903 = vmatmul.mubr.f32.gmra.mrb[0].mxu0 %v560
    %v904 = vpop.f32.mrb[0].mxu0
    %v905 = vadd.f32 0.0, %v904
    %v906 = vpop.f32.mrb[0].mxu0
    %907 = vdwg.mxu0
    %908 = vst [vmem:[#allocation4] sm:$0xff] %v870
    %909 = vst [vmem:[#allocation4 + $0x8] sm:$0xff] %v875
    %910 = vst [vmem:[#allocation4 + $0x10] sm:$0xff] %v880
    %911 = vst [vmem:[#allocation4 + $0x18] sm:$0xff] %v885
    %912 = vst [vmem:[#allocation4 + $0x20] sm:$0xff] %v890
    %913 = vst [vmem:[#allocation4 + $0x28] sm:$0xff] %v895
    %914 = vst [vmem:[#allocation4 + $0x30] sm:$0xff] %v900
    %915 = vst [vmem:[#allocation4 + $0x38] sm:$0xff] %v905
    // Predicated region
    $region30: #{tpu_custom_call.1} parent=1 // pred_check
      _
    $region31: #{tpu_custom_call.1} parent=1 // pred_check_branch
      %917 = sbr.rel (0) target = $region33
    $region32: #{tpu_custom_call.1} parent=1 // pred_region
      %s919 = ssub.s32 1024, 1024
      %920 = vsyncadd [#allocation3], %s919
      %s921 = sshll.u32 [#allocation2], 4
      %s922 = int_to_ptr.vmem [resolvable:$true] %s921
      %927 = dma.vmem_to_hbm [thread:$0]  %s922, 1024, %s7, [#allocation3], 128, 128, 8
    $region33: #{tpu_custom_call.1} parent=1 // pred_fallthru
      _
    // Predicated region
    $region34: #{tpu_custom_call.1} parent=1 // pred_check
      _
    $region35: #{tpu_custom_call.1} parent=1 // pred_check_branch
      %929 = sbr.rel (0) target = $region37
    $region36: #{tpu_custom_call.1} parent=1 // pred_region
      %s931 = ssub.s32 1024, 1024
      %932 = vsyncadd [#allocation5], %s931
      %s933 = sshll.u32 [#allocation4], 4
      %s934 = int_to_ptr.vmem [resolvable:$true] %s933
      %939 = dma.vmem_to_hbm [thread:$0]  %s934, 1024, %s8, [#allocation5], 128, 128, 8
    $region37: #{tpu_custom_call.1} parent=1 // pred_fallthru
      _
    // Predicated region
    $region38: #{tpu_custom_call.1} parent=1 // pred_check
      _
    $region39: #{tpu_custom_call.1} parent=1 // pred_check_branch
      %941 = sbr.rel (0) target = $region41
    $region40: #{tpu_custom_call.1} parent=1 // pred_region
      %942 = dma.done [#allocation3], 1024
    $region41: #{tpu_custom_call.1} parent=1 // pred_fallthru
      _
    // Predicated region
    $region42: #{tpu_custom_call.1} parent=1 // pred_check
      _
    $region43: #{tpu_custom_call.1} parent=1 // pred_check_branch
      %944 = sbr.rel (0) target = $region45
    $region44: #{tpu_custom_call.1} parent=1 // pred_region
      %945 = dma.done [#allocation5], 1024
    $region45: #{tpu_custom_call.1} parent=1 // pred_fallthru
      _
    %946 = vsyncpa [#allocation3], 1
    %947 = vsyncpa [#allocation5], 1

</llo_original>
